<compile_context>
chip_gen: v7x
topology: tpu7x:2x2x1
jax: 0.10.0
libtpu: 0.0.40
codegen_flags: <defaults>
</compile_context>

<pallas_src>
import jax
import jax.numpy as jnp
from jax.experimental import pallas as pl
from jax.experimental.pallas import tpu as pltpu

# ---- slots in the packed weight / bias slabs ------------------------------------
IDX_FD0, IDX_R0A, IDX_R0B, IDX_D1, IDX_O1, IDX_R1A, IDX_R1B, IDX_OUT = range(8)
N_MATS = 8
HP = 128  # lane-dense padded feature width


def _leaky(x, slope):
    return jnp.where(x >= 0, x, slope * x)


# ---------------------------------- kernel ---------------------------------------
def marker_decoder_kernel(xoff0_ref, off1_ref, w_ref, b_ref, out_ref):
    """One batch tile.  xoff0/off1: (TB, 128) bf16;  w: (8,128,128) bf16;
    b: (8,128) f32;  out: (TB, 128) f32."""
    x16 = xoff0_ref[...]        # [x | off0 | 0-pad], bf16
    o1_16 = off1_ref[...]       # [off1 | 0-pad],     bf16

    def mm(a16, idx):
        # bf16 x bf16 -> f32 on the MXU, f32 bias add on the VPU.
        return (jnp.dot(a16, w_ref[idx], preferred_element_type=jnp.float32)
                + b_ref[pl.ds(idx, 1), :])

    def to16(h):
        return h.astype(jnp.bfloat16)

    def res_block(h, ia, ib):
        r = _leaky(mm(to16(h), ia), 0.2)
        return h + mm(to16(r), ib)

    # Hoisted: the offset branch of DenseBlock1 is used twice but is invariant.
    off1_contrib = mm(o1_16, IDX_O1)                      # (TB, 128) f32

    def dense1(h):
        return mm(to16(h), IDX_D1) + off1_contrib

    # layers[0]: fused DenseBlock0 (x & off0 in one matmul) -> ResidualBlock0
    h = mm(x16, IDX_FD0)
    h = res_block(h, IDX_R0A, IDX_R0B)
    # layers[1]: DenseBlock1 -> ResidualBlock1
    h = dense1(h)
    h = res_block(h, IDX_R1A, IDX_R1B)
    # layers[2]: SAME DenseBlock1/ResidualBlock1 again, LeakyReLU(0.5), DenseBlock out
    h = dense1(h)
    h = res_block(h, IDX_R1A, IDX_R1B)
    h = _leaky(h, 0.5)
    out_ref[...] = mm(to16(h), IDX_OUT)


# ------------------------------- param packing -----------------------------------
def pack_params(p, hidden, off_dim0, off_dim1, output_size):
    """Pack all Linear weights/biases into one bf16 weight slab + one f32 bias slab.
    Padding is zero so padded lanes stay exactly zero through the whole network."""
    H = hidden
    w = jnp.zeros((N_MATS, HP, HP), jnp.float32)
    b = jnp.zeros((N_MATS, HP), jnp.float32)

    # fused DenseBlock0: input = [x (H) | off0 (off_dim0) | 0-pad]
    w = w.at[IDX_FD0, :H, :H].set(p["w_d0"])
    w = w.at[IDX_FD0, H:H + off_dim0, :H].set(p["w_o0"])
    b = b.at[IDX_FD0, :H].set(p["b_d0"][0] + p["b_o0"][0])

    for idx, wk, bk in ((IDX_R0A, "w_r0a", "b_r0a"),
                        (IDX_R0B, "w_r0b", "b_r0b"),
                        (IDX_D1,  "w_d1",  "b_d1"),
                        (IDX_R1A, "w_r1a", "b_r1a"),
                        (IDX_R1B, "w_r1b", "b_r1b")):
        W, Bv = p[wk], p[bk]
        w = w.at[idx, :W.shape[0], :W.shape[1]].set(W)
        b = b.at[idx, :Bv.shape[1]].set(Bv[0])

    # offset branch of DenseBlock1: input = [off1 | 0-pad]
    w = w.at[IDX_O1, :off_dim1, :H].set(p["w_o1"])
    b = b.at[IDX_O1, :H].set(p["b_o1"][0])

    # final DenseBlock (hidden -> output_size), no offset
    w = w.at[IDX_OUT, :H, :output_size].set(p["w_out"])
    b = b.at[IDX_OUT, :output_size].set(p["b_out"][0])

    return w.astype(jnp.bfloat16), b


# --------------------------------- wrapper ---------------------------------------
def marker_decoder(x, off0, off1, params):
    """x: (B, hidden), off0: (B, offset_dims[-1]), off1: (B, offset_dims[-2])."""
    B, hidden = x.shape
    off_dim0, off_dim1 = off0.shape[1], off1.shape[1]
    output_size = params["w_out"].shape[1]
    assert hidden + off_dim0 <= HP and off_dim1 <= HP
    assert hidden <= HP and output_size <= HP

    w_slab, b_slab = pack_params(params, hidden, off_dim0, off_dim1, output_size)

    # Batch tiling: big lane-dense tiles for large batches (amortize ~0.35us/step),
    # one small (multiple-of-8) tile otherwise.  VMEM use stays tiny either way:
    # resident weights 256 KiB + double-buffered activations << v7x's 64 MiB.
    if B >= 512:
        TB = 512
    elif B >= 256:
        TB = 256
    else:
        TB = max(8, -(-B // 8) * 8)
    nb = -(-B // TB)
    Bp = nb * TB

    # Lane-dense, zero-padded activation inputs (bf16 halves activation DMA bytes).
    xoff0 = jnp.zeros((Bp, HP), jnp.float32)
    xoff0 = xoff0.at[:B, :hidden].set(x)
    xoff0 = xoff0.at[:B, hidden:hidden + off_dim0].set(off0)
    off1p = jnp.zeros((Bp, HP), jnp.float32).at[:B, :off_dim1].set(off1)

    out = pl.pallas_call(
        marker_decoder_kernel,
        grid=(nb,),
        in_specs=[
            pl.BlockSpec((TB, HP), lambda i: (i, 0)),              # [x|off0] tile
            pl.BlockSpec((TB, HP), lambda i: (i, 0)),              # off1 tile
            pl.BlockSpec((N_MATS, HP, HP), lambda i: (0, 0, 0)),   # weights (resident)
            pl.BlockSpec((N_MATS, HP), lambda i: (0, 0)),          # biases  (resident)
        ],
        out_specs=pl.BlockSpec((TB, HP), lambda i: (i, 0)),
        out_shape=jax.ShapeDtypeStruct((Bp, HP), jnp.float32),
        compiler_params=pltpu.CompilerParams(
            dimension_semantics=("parallel",)),
    )(xoff0.astype(jnp.bfloat16), off1p.astype(jnp.bfloat16), w_slab, b_slab)

    return out[:B, :output_size]


# -------------------------- pure-JAX reference -----------------------------------
def marker_decoder_ref(x, off0, off1, p):
    """Follows the torch layer structure directly (unfused, unhoisted, unpadded),
    with matched precision: bf16 matmul inputs, f32 accumulation & elementwise."""
    def lin(h, w, b):
        return jnp.dot(h.astype(jnp.bfloat16), w.astype(jnp.bfloat16),
                       preferred_element_type=jnp.float32) + b

    def res(h, wa, ba, wb, bb):
        r = lin(h, wa, ba)
        r = jnp.where(r >= 0, r, 0.2 * r)
        return h + lin(r, wb, bb)

    def d0(h):
        return lin(h, p["w_d0"], p["b_d0"]) + lin(off0, p["w_o0"], p["b_o0"])

    def d1(h):
        return lin(h, p["w_d1"], p["b_d1"]) + lin(off1, p["w_o1"], p["b_o1"])

    h = d0(x)
    h = res(h, p["w_r0a"], p["b_r0a"], p["w_r0b"], p["b_r0b"])
    h = d1(h)
    h = res(h, p["w_r1a"], p["b_r1a"], p["w_r1b"], p["b_r1b"])
    h = d1(h)
    h = res(h, p["w_r1a"], p["b_r1a"], p["w_r1b"], p["b_r1b"])
    h = jnp.where(h >= 0, h, 0.5 * h)
    return lin(h, p["w_out"], p["b_out"])


def init_params(key, hidden, output_size, off_dim0, off_dim1):
    shapes = {
        "w_d0": (hidden, hidden),    "b_d0": (1, hidden),
        "w_o0": (off_dim0, hidden),  "b_o0": (1, hidden),
        "w_r0a": (hidden, hidden),   "b_r0a": (1, hidden),
        "w_r0b": (hidden, hidden),   "b_r0b": (1, hidden),
        "w_d1": (hidden, hidden),    "b_d1": (1, hidden),
        "w_o1": (off_dim1, hidden),  "b_o1": (1, hidden),
        "w_r1a": (hidden, hidden),   "b_r1a": (1, hidden),
        "w_r1b": (hidden, hidden),   "b_r1b": (1, hidden),
        "w_out": (hidden, output_size), "b_out": (1, output_size),
    }
    params = {}
    keys = jax.random.split(key, len(shapes))
    for k, (name, shp) in zip(keys, sorted(shapes.items())):
        params[name] = jax.random.normal(k, shp, dtype=jnp.float32) * 0.1
    return params


if __name__ == "__main__":
    # Sizes consistent with the module:
    #   hidden_size = 64, output_size (= enc.input_size) = 96,
    #   offset_dims = [16, 32] -> D0 uses offset_dims[-1]=32, D1 uses offset_dims[-2]=16
    B, hidden, output_size = 8, 64, 96
    off_dim0, off_dim1 = 32, 16

    key = jax.random.PRNGKey(0)
    k_x, k_o0, k_o1, k_p = jax.random.split(key, 4)

    x = jax.random.normal(k_x, (B, hidden), dtype=jnp.float32)
    off0 = jax.random.normal(k_o0, (B, off_dim0), dtype=jnp.float32)  # offset[0]
    off1 = jax.random.normal(k_o1, (B, off_dim1), dtype=jnp.float32)  # offset[1]
    params = init_params(k_p, hidden, output_size, off_dim0, off_dim1)

    out = marker_decoder(x, off0, off1, params)
    out = jax.block_until_ready(out)

    ref = marker_decoder_ref(x, off0, off1, params)
    assert out.shape == (B, output_size)
    assert jnp.allclose(out, ref, atol=1e-2, rtol=1e-2), "mismatch vs reference"

    print("KERNEL_OK")
</pallas_src>

<mosaic_0001>
module attributes {stable_mosaic.version = 11 : i64} {
  func.func @marker_decoder_kernel(%arg0: i32, %arg1: memref<8x128xbf16, #tpu.memory_space<vmem>>, %arg2: memref<8x128xbf16, #tpu.memory_space<vmem>>, %arg3: memref<8x128x128xbf16, #tpu.memory_space<vmem>>, %arg4: memref<8x128xf32, #tpu.memory_space<vmem>>, %arg5: memref<8x128xf32, #tpu.memory_space<vmem>>) attributes {dimension_semantics = [#tpu.dimension_semantics<parallel>], iteration_bounds = array<i64: 1>, scalar_prefetch = 0 : i64, scratch_operands = 0 : i64, tpu.core_type = #tpu.core_type<tc>, window_params = [{transform_indices = @transform_0, window_bounds = array<i64: 8, 128>}, {transform_indices = @transform_1, window_bounds = array<i64: 8, 128>}, {pipeline_mode = #tpu.pipeline_mode<synchronous>, transform_indices = @transform_2, window_bounds = array<i64: 8, 128, 128>}, {pipeline_mode = #tpu.pipeline_mode<synchronous>, transform_indices = @transform_3, window_bounds = array<i64: 8, 128>}, {transform_indices = @transform_4, window_bounds = array<i64: 8, 128>}]} {
    %c0 = arith.constant 0 : index
    %c0_0 = arith.constant 0 : index
    %0 = vector.load %arg1[%c0, %c0_0] : memref<8x128xbf16, #tpu.memory_space<vmem>>, vector<8x128xbf16>
    %c0_1 = arith.constant 0 : index
    %c0_2 = arith.constant 0 : index
    %1 = vector.load %arg2[%c0_1, %c0_2] : memref<8x128xbf16, #tpu.memory_space<vmem>>, vector<8x128xbf16>
    %c4 = arith.constant 4 : index
    %c0_3 = arith.constant 0 : index
    %c0_4 = arith.constant 0 : index
    %2 = vector.load %arg3[%c4, %c0_3, %c0_4] : memref<8x128x128xbf16, #tpu.memory_space<vmem>>, vector<1x128x128xbf16>
    %3 = vector.shape_cast %2 : vector<1x128x128xbf16> to vector<128x128xbf16>
    %cst = arith.constant dense<0.000000e+00> : vector<8x128xf32>
    %4 = tpu.matmul %1, %3, %cst {dimension_numbers = #tpu.dot_dimension_numbers<[1], [0], [0], [1], [0, 0, 1, 1], [], []>} : vector<8x128xbf16>, vector<128x128xbf16>, vector<8x128xf32> -> vector<8x128xf32>
    %c4_5 = arith.constant 4 : index
    %c0_6 = arith.constant 0 : index
    %5 = vector.load %arg4[%c4_5, %c0_6] : memref<8x128xf32, #tpu.memory_space<vmem>>, vector<1x128xf32>
    %6 = vector.broadcast %5 : vector<1x128xf32> to vector<8x128xf32>
    %7 = arith.addf %4, %6 : vector<8x128xf32>
    %c0_7 = arith.constant 0 : index
    %c0_8 = arith.constant 0 : index
    %c0_9 = arith.constant 0 : index
    %8 = vector.load %arg3[%c0_7, %c0_8, %c0_9] : memref<8x128x128xbf16, #tpu.memory_space<vmem>>, vector<1x128x128xbf16>
    %9 = vector.shape_cast %8 : vector<1x128x128xbf16> to vector<128x128xbf16>
    %cst_10 = arith.constant dense<0.000000e+00> : vector<8x128xf32>
    %10 = tpu.matmul %0, %9, %cst_10 {dimension_numbers = #tpu.dot_dimension_numbers<[1], [0], [0], [1], [0, 0, 1, 1], [], []>} : vector<8x128xbf16>, vector<128x128xbf16>, vector<8x128xf32> -> vector<8x128xf32>
    %c0_11 = arith.constant 0 : index
    %c0_12 = arith.constant 0 : index
    %11 = vector.load %arg4[%c0_11, %c0_12] : memref<8x128xf32, #tpu.memory_space<vmem>>, vector<1x128xf32>
    %12 = vector.broadcast %11 : vector<1x128xf32> to vector<8x128xf32>
    %13 = arith.addf %10, %12 : vector<8x128xf32>
    %14 = arith.truncf %13 : vector<8x128xf32> to vector<8x128xbf16>
    %c1 = arith.constant 1 : index
    %c0_13 = arith.constant 0 : index
    %c0_14 = arith.constant 0 : index
    %15 = vector.load %arg3[%c1, %c0_13, %c0_14] : memref<8x128x128xbf16, #tpu.memory_space<vmem>>, vector<1x128x128xbf16>
    %16 = vector.shape_cast %15 : vector<1x128x128xbf16> to vector<128x128xbf16>
    %cst_15 = arith.constant dense<0.000000e+00> : vector<8x128xf32>
    %17 = tpu.matmul %14, %16, %cst_15 {dimension_numbers = #tpu.dot_dimension_numbers<[1], [0], [0], [1], [0, 0, 1, 1], [], []>} : vector<8x128xbf16>, vector<128x128xbf16>, vector<8x128xf32> -> vector<8x128xf32>
    %c1_16 = arith.constant 1 : index
    %c0_17 = arith.constant 0 : index
    %18 = vector.load %arg4[%c1_16, %c0_17] : memref<8x128xf32, #tpu.memory_space<vmem>>, vector<1x128xf32>
    %19 = vector.broadcast %18 : vector<1x128xf32> to vector<8x128xf32>
    %20 = arith.addf %17, %19 : vector<8x128xf32>
    %cst_18 = arith.constant 0.000000e+00 : f32
    %21 = vector.broadcast %cst_18 : f32 to vector<8x128xf32>
    %22 = arith.cmpf oge, %20, %21 : vector<8x128xf32>
    %cst_19 = arith.constant 2.000000e-01 : f32
    %23 = vector.broadcast %cst_19 : f32 to vector<8x128xf32>
    %24 = arith.mulf %23, %20 : vector<8x128xf32>
    %25 = arith.select %22, %20, %24 : vector<8x128xi1>, vector<8x128xf32>
    %26 = arith.truncf %25 : vector<8x128xf32> to vector<8x128xbf16>
    %c2 = arith.constant 2 : index
    %c0_20 = arith.constant 0 : index
    %c0_21 = arith.constant 0 : index
    %27 = vector.load %arg3[%c2, %c0_20, %c0_21] : memref<8x128x128xbf16, #tpu.memory_space<vmem>>, vector<1x128x128xbf16>
    %28 = vector.shape_cast %27 : vector<1x128x128xbf16> to vector<128x128xbf16>
    %cst_22 = arith.constant dense<0.000000e+00> : vector<8x128xf32>
    %29 = tpu.matmul %26, %28, %cst_22 {dimension_numbers = #tpu.dot_dimension_numbers<[1], [0], [0], [1], [0, 0, 1, 1], [], []>} : vector<8x128xbf16>, vector<128x128xbf16>, vector<8x128xf32> -> vector<8x128xf32>
    %c2_23 = arith.constant 2 : index
    %c0_24 = arith.constant 0 : index
    %30 = vector.load %arg4[%c2_23, %c0_24] : memref<8x128xf32, #tpu.memory_space<vmem>>, vector<1x128xf32>
    %31 = vector.broadcast %30 : vector<1x128xf32> to vector<8x128xf32>
    %32 = arith.addf %29, %31 : vector<8x128xf32>
    %33 = arith.addf %13, %32 : vector<8x128xf32>
    %34 = arith.truncf %33 : vector<8x128xf32> to vector<8x128xbf16>
    %c3 = arith.constant 3 : index
    %c0_25 = arith.constant 0 : index
    %c0_26 = arith.constant 0 : index
    %35 = vector.load %arg3[%c3, %c0_25, %c0_26] : memref<8x128x128xbf16, #tpu.memory_space<vmem>>, vector<1x128x128xbf16>
    %36 = vector.shape_cast %35 : vector<1x128x128xbf16> to vector<128x128xbf16>
    %cst_27 = arith.constant dense<0.000000e+00> : vector<8x128xf32>
    %37 = tpu.matmul %34, %36, %cst_27 {dimension_numbers = #tpu.dot_dimension_numbers<[1], [0], [0], [1], [0, 0, 1, 1], [], []>} : vector<8x128xbf16>, vector<128x128xbf16>, vector<8x128xf32> -> vector<8x128xf32>
    %c3_28 = arith.constant 3 : index
    %c0_29 = arith.constant 0 : index
    %38 = vector.load %arg4[%c3_28, %c0_29] : memref<8x128xf32, #tpu.memory_space<vmem>>, vector<1x128xf32>
    %39 = vector.broadcast %38 : vector<1x128xf32> to vector<8x128xf32>
    %40 = arith.addf %37, %39 : vector<8x128xf32>
    %41 = arith.addf %40, %7 : vector<8x128xf32>
    %42 = arith.truncf %41 : vector<8x128xf32> to vector<8x128xbf16>
    %c5 = arith.constant 5 : index
    %c0_30 = arith.constant 0 : index
    %c0_31 = arith.constant 0 : index
    %43 = vector.load %arg3[%c5, %c0_30, %c0_31] : memref<8x128x128xbf16, #tpu.memory_space<vmem>>, vector<1x128x128xbf16>
    %44 = vector.shape_cast %43 : vector<1x128x128xbf16> to vector<128x128xbf16>
    %cst_32 = arith.constant dense<0.000000e+00> : vector<8x128xf32>
    %45 = tpu.matmul %42, %44, %cst_32 {dimension_numbers = #tpu.dot_dimension_numbers<[1], [0], [0], [1], [0, 0, 1, 1], [], []>} : vector<8x128xbf16>, vector<128x128xbf16>, vector<8x128xf32> -> vector<8x128xf32>
    %c5_33 = arith.constant 5 : index
    %c0_34 = arith.constant 0 : index
    %46 = vector.load %arg4[%c5_33, %c0_34] : memref<8x128xf32, #tpu.memory_space<vmem>>, vector<1x128xf32>
    %47 = vector.broadcast %46 : vector<1x128xf32> to vector<8x128xf32>
    %48 = arith.addf %45, %47 : vector<8x128xf32>
    %cst_35 = arith.constant 0.000000e+00 : f32
    %49 = vector.broadcast %cst_35 : f32 to vector<8x128xf32>
    %50 = arith.cmpf oge, %48, %49 : vector<8x128xf32>
    %cst_36 = arith.constant 2.000000e-01 : f32
    %51 = vector.broadcast %cst_36 : f32 to vector<8x128xf32>
    %52 = arith.mulf %51, %48 : vector<8x128xf32>
    %53 = arith.select %50, %48, %52 : vector<8x128xi1>, vector<8x128xf32>
    %54 = arith.truncf %53 : vector<8x128xf32> to vector<8x128xbf16>
    %c6 = arith.constant 6 : index
    %c0_37 = arith.constant 0 : index
    %c0_38 = arith.constant 0 : index
    %55 = vector.load %arg3[%c6, %c0_37, %c0_38] : memref<8x128x128xbf16, #tpu.memory_space<vmem>>, vector<1x128x128xbf16>
    %56 = vector.shape_cast %55 : vector<1x128x128xbf16> to vector<128x128xbf16>
    %cst_39 = arith.constant dense<0.000000e+00> : vector<8x128xf32>
    %57 = tpu.matmul %54, %56, %cst_39 {dimension_numbers = #tpu.dot_dimension_numbers<[1], [0], [0], [1], [0, 0, 1, 1], [], []>} : vector<8x128xbf16>, vector<128x128xbf16>, vector<8x128xf32> -> vector<8x128xf32>
    %c6_40 = arith.constant 6 : index
    %c0_41 = arith.constant 0 : index
    %58 = vector.load %arg4[%c6_40, %c0_41] : memref<8x128xf32, #tpu.memory_space<vmem>>, vector<1x128xf32>
    %59 = vector.broadcast %58 : vector<1x128xf32> to vector<8x128xf32>
    %60 = arith.addf %57, %59 : vector<8x128xf32>
    %61 = arith.addf %41, %60 : vector<8x128xf32>
    %62 = arith.truncf %61 : vector<8x128xf32> to vector<8x128xbf16>
    %c3_42 = arith.constant 3 : index
    %c0_43 = arith.constant 0 : index
    %c0_44 = arith.constant 0 : index
    %63 = vector.load %arg3[%c3_42, %c0_43, %c0_44] : memref<8x128x128xbf16, #tpu.memory_space<vmem>>, vector<1x128x128xbf16>
    %64 = vector.shape_cast %63 : vector<1x128x128xbf16> to vector<128x128xbf16>
    %cst_45 = arith.constant dense<0.000000e+00> : vector<8x128xf32>
    %65 = tpu.matmul %62, %64, %cst_45 {dimension_numbers = #tpu.dot_dimension_numbers<[1], [0], [0], [1], [0, 0, 1, 1], [], []>} : vector<8x128xbf16>, vector<128x128xbf16>, vector<8x128xf32> -> vector<8x128xf32>
    %c3_46 = arith.constant 3 : index
    %c0_47 = arith.constant 0 : index
    %66 = vector.load %arg4[%c3_46, %c0_47] : memref<8x128xf32, #tpu.memory_space<vmem>>, vector<1x128xf32>
    %67 = vector.broadcast %66 : vector<1x128xf32> to vector<8x128xf32>
    %68 = arith.addf %65, %67 : vector<8x128xf32>
    %69 = arith.addf %68, %7 : vector<8x128xf32>
    %70 = arith.truncf %69 : vector<8x128xf32> to vector<8x128xbf16>
    %c5_48 = arith.constant 5 : index
    %c0_49 = arith.constant 0 : index
    %c0_50 = arith.constant 0 : index
    %71 = vector.load %arg3[%c5_48, %c0_49, %c0_50] : memref<8x128x128xbf16, #tpu.memory_space<vmem>>, vector<1x128x128xbf16>
    %72 = vector.shape_cast %71 : vector<1x128x128xbf16> to vector<128x128xbf16>
    %cst_51 = arith.constant dense<0.000000e+00> : vector<8x128xf32>
    %73 = tpu.matmul %70, %72, %cst_51 {dimension_numbers = #tpu.dot_dimension_numbers<[1], [0], [0], [1], [0, 0, 1, 1], [], []>} : vector<8x128xbf16>, vector<128x128xbf16>, vector<8x128xf32> -> vector<8x128xf32>
    %c5_52 = arith.constant 5 : index
    %c0_53 = arith.constant 0 : index
    %74 = vector.load %arg4[%c5_52, %c0_53] : memref<8x128xf32, #tpu.memory_space<vmem>>, vector<1x128xf32>
    %75 = vector.broadcast %74 : vector<1x128xf32> to vector<8x128xf32>
    %76 = arith.addf %73, %75 : vector<8x128xf32>
    %cst_54 = arith.constant 0.000000e+00 : f32
    %77 = vector.broadcast %cst_54 : f32 to vector<8x128xf32>
    %78 = arith.cmpf oge, %76, %77 : vector<8x128xf32>
    %cst_55 = arith.constant 2.000000e-01 : f32
    %79 = vector.broadcast %cst_55 : f32 to vector<8x128xf32>
    %80 = arith.mulf %79, %76 : vector<8x128xf32>
    %81 = arith.select %78, %76, %80 : vector<8x128xi1>, vector<8x128xf32>
    %82 = arith.truncf %81 : vector<8x128xf32> to vector<8x128xbf16>
    %c6_56 = arith.constant 6 : index
    %c0_57 = arith.constant 0 : index
    %c0_58 = arith.constant 0 : index
    %83 = vector.load %arg3[%c6_56, %c0_57, %c0_58] : memref<8x128x128xbf16, #tpu.memory_space<vmem>>, vector<1x128x128xbf16>
    %84 = vector.shape_cast %83 : vector<1x128x128xbf16> to vector<128x128xbf16>
    %cst_59 = arith.constant dense<0.000000e+00> : vector<8x128xf32>
    %85 = tpu.matmul %82, %84, %cst_59 {dimension_numbers = #tpu.dot_dimension_numbers<[1], [0], [0], [1], [0, 0, 1, 1], [], []>} : vector<8x128xbf16>, vector<128x128xbf16>, vector<8x128xf32> -> vector<8x128xf32>
    %c6_60 = arith.constant 6 : index
    %c0_61 = arith.constant 0 : index
    %86 = vector.load %arg4[%c6_60, %c0_61] : memref<8x128xf32, #tpu.memory_space<vmem>>, vector<1x128xf32>
    %87 = vector.broadcast %86 : vector<1x128xf32> to vector<8x128xf32>
    %88 = arith.addf %85, %87 : vector<8x128xf32>
    %89 = arith.addf %69, %88 : vector<8x128xf32>
    %cst_62 = arith.constant 0.000000e+00 : f32
    %90 = vector.broadcast %cst_62 : f32 to vector<8x128xf32>
    %91 = arith.cmpf oge, %89, %90 : vector<8x128xf32>
    %cst_63 = arith.constant 5.000000e-01 : f32
    %92 = vector.broadcast %cst_63 : f32 to vector<8x128xf32>
    %93 = arith.mulf %92, %89 : vector<8x128xf32>
    %94 = arith.select %91, %89, %93 : vector<8x128xi1>, vector<8x128xf32>
    %95 = arith.truncf %94 : vector<8x128xf32> to vector<8x128xbf16>
    %c7 = arith.constant 7 : index
    %c0_64 = arith.constant 0 : index
    %c0_65 = arith.constant 0 : index
    %96 = vector.load %arg3[%c7, %c0_64, %c0_65] : memref<8x128x128xbf16, #tpu.memory_space<vmem>>, vector<1x128x128xbf16>
    %97 = vector.shape_cast %96 : vector<1x128x128xbf16> to vector<128x128xbf16>
    %cst_66 = arith.constant dense<0.000000e+00> : vector<8x128xf32>
    %98 = tpu.matmul %95, %97, %cst_66 {dimension_numbers = #tpu.dot_dimension_numbers<[1], [0], [0], [1], [0, 0, 1, 1], [], []>} : vector<8x128xbf16>, vector<128x128xbf16>, vector<8x128xf32> -> vector<8x128xf32>
    %c7_67 = arith.constant 7 : index
    %c0_68 = arith.constant 0 : index
    %99 = vector.load %arg4[%c7_67, %c0_68] : memref<8x128xf32, #tpu.memory_space<vmem>>, vector<1x128xf32>
    %100 = vector.broadcast %99 : vector<1x128xf32> to vector<8x128xf32>
    %101 = arith.addf %98, %100 : vector<8x128xf32>
    %c0_69 = arith.constant 0 : index
    %c0_70 = arith.constant 0 : index
    %102 = vector.load %arg5[%c0_69, %c0_70] : memref<8x128xf32, #tpu.memory_space<vmem>>, vector<8x128xf32>
    tpu.vector_store %arg5[%c0_69, %c0_70], %101 {strides = array<i32>} : memref<8x128xf32, #tpu.memory_space<vmem>>, vector<8x128xf32>,
    return
  }
  func.func @transform_0(%arg0: i32) -> (i32, i32) {
    %c0_i32 = arith.constant 0 : i32
    %c0_i32_0 = arith.constant 0 : i32
    return %arg0, %c0_i32 : i32, i32
  }
  func.func @transform_1(%arg0: i32) -> (i32, i32) {
    %c0_i32 = arith.constant 0 : i32
    %c0_i32_0 = arith.constant 0 : i32
    return %arg0, %c0_i32 : i32, i32
  }
  func.func @transform_2(%arg0: i32) -> (i32, i32, i32) {
    %c0_i32 = arith.constant 0 : i32
    %c0_i32_0 = arith.constant 0 : i32
    %c0_i32_1 = arith.constant 0 : i32
    %c0_i32_2 = arith.constant 0 : i32
    return %c0_i32, %c0_i32_0, %c0_i32_1 : i32, i32, i32
  }
  func.func @transform_3(%arg0: i32) -> (i32, i32) {
    %c0_i32 = arith.constant 0 : i32
    %c0_i32_0 = arith.constant 0 : i32
    %c0_i32_1 = arith.constant 0 : i32
    return %c0_i32, %c0_i32_0 : i32, i32
  }
  func.func @transform_4(%arg0: i32) -> (i32, i32) {
    %c0_i32 = arith.constant 0 : i32
    %c0_i32_0 = arith.constant 0 : i32
    return %arg0, %c0_i32 : i32, i32
  }
}

</mosaic_0001>

<llo_original>
// kernel: tpu_custom_call.1
$region0: #{tpu_custom_call.1}
  #allocation0 [shape = 'u32[]', space=smem, size = 0x4, offset = 0x4, fixed_abs, tag = 'smem constant byte address 0x4 - core index']
  #allocation1 [shape = 'u32[144,128]{1,0:T(1,128)}', space=vmem, size = 0x12000, scoped, tag = 'internal scratch']
  %s0 = inlined_call_operand.hbm [shape: bf16[8,128], index: 0, kind: input, shape index: {}]
  %s1 = inlined_call_operand.hbm [shape: bf16[8,128], index: 1, kind: input, shape index: {}]
  %s2 = inlined_call_operand.hbm [shape: bf16[8,128,128], index: 2, kind: input, shape index: {}]
  %s3 = inlined_call_operand.vmem [shape: f32[8,128], index: 3, kind: input, shape index: {}]
  %s4 = inlined_call_operand.hbm [shape: f32[8,128], index: 4, kind: output, shape index: {}]
  %s5 = sld [smem:[#allocation0]]
  $region38: #{tpu_custom_call.1} parent=0
    _
  %s7 = ssub.s32 1, %s5
  %s8 = scalar_select 0, %s7, %s5
  $region1: #{tpu_custom_call.1} parent=0
    #allocation2 [shape = 'u8[2048]{0}', space=vmem, size = 0x800, scoped, tag = 'input window, operand 0, single buffered']
    #allocation3 [shape = 's32[1]{0}', space=sflag, size = 0x4, scoped, tag = 'scoped memory for tpu_custom_call.1']
    #allocation4 [shape = 's32[1]{0}', space=sflag, size = 0x4, scoped, tag = 'scoped memory for tpu_custom_call.1']
    #allocation5 [shape = 'u8[2048]{0}', space=vmem, size = 0x800, scoped, tag = 'input window, operand 1, single buffered']
    #allocation6 [shape = 's32[1]{0}', space=sflag, size = 0x4, scoped, tag = 'scoped memory for tpu_custom_call.1']
    #allocation7 [shape = 'u8[262144]{0}', space=vmem, size = 0x40000, scoped, tag = 'input window, operand 2, single buffered']
    #allocation8 [shape = 'u8[4096]{0}', space=vmem, size = 0x1000, scoped, tag = 'output window, operand 0, single buffered']
    %9 = vsyncpa [#allocation3], 0
    %10 = vsyncpa [#allocation6], 0
    %11 = vsyncpa [#allocation4], 0
    // Predicated region
    $region2: #{tpu_custom_call.1} parent=1 // pred_check
      _
    $region3: #{tpu_custom_call.1} parent=1 // pred_check_branch
      %13 = sbr.rel (0) target = $region5
    $region4: #{tpu_custom_call.1} parent=1 // pred_region
      %s15 = ssub.s32 64, 64
      %16 = vsyncadd [#allocation3], %s15
      %s18 = sshll.u32 [#allocation2], 4
      %s19 = int_to_ptr.vmem [resolvable:$true] %s18
      %21 = dma.hbm_to_vmem [thread:$0]  %s0, 64, %s19, [#allocation3]
    $region5: #{tpu_custom_call.1} parent=1 // pred_fallthru
      _
    // Predicated region
    $region6: #{tpu_custom_call.1} parent=1 // pred_check
      _
    $region7: #{tpu_custom_call.1} parent=1 // pred_check_branch
      %23 = sbr.rel (0) target = $region9
    $region8: #{tpu_custom_call.1} parent=1 // pred_region
      %s25 = ssub.s32 64, 64
      %26 = vsyncadd [#allocation6], %s25
      %s28 = sshll.u32 [#allocation5], 4
      %s29 = int_to_ptr.vmem [resolvable:$true] %s28
      %31 = dma.hbm_to_vmem [thread:$0]  %s1, 64, %s29, [#allocation6]
    $region9: #{tpu_custom_call.1} parent=1 // pred_fallthru
      _
    // Predicated region
    $region10: #{tpu_custom_call.1} parent=1 // pred_check
      _
    $region11: #{tpu_custom_call.1} parent=1 // pred_check_branch
      %33 = sbr.rel (0) target = $region13
    $region12: #{tpu_custom_call.1} parent=1 // pred_region
      %s35 = ssub.s32 8192, 8192
      %36 = vsyncadd [#allocation6], %s35
      %s37 = sshll.u32 [#allocation7], 4
      %s38 = int_to_ptr.vmem [resolvable:$true] %s37
      %43 = dma.hbm_to_vmem [thread:$0]  %s2, 8192, %s38, [#allocation6], 64, 64, 4
    $region13: #{tpu_custom_call.1} parent=1 // pred_fallthru
      _
    // Predicated region
    $region14: #{tpu_custom_call.1} parent=1 // pred_check
      _
    $region15: #{tpu_custom_call.1} parent=1 // pred_check_branch
      %45 = sbr.rel (0) target = $region17
    $region16: #{tpu_custom_call.1} parent=1 // pred_region
      _
    $region17: #{tpu_custom_call.1} parent=1 // pred_fallthru
      _
    // Predicated region
    $region18: #{tpu_custom_call.1} parent=1 // pred_check
      _
    $region19: #{tpu_custom_call.1} parent=1 // pred_check_branch
      %47 = sbr.rel (0) target = $region21
    $region20: #{tpu_custom_call.1} parent=1 // pred_region
      %48 = dma.done [#allocation3], 64
    $region21: #{tpu_custom_call.1} parent=1 // pred_fallthru
      _
    // Predicated region
    $region22: #{tpu_custom_call.1} parent=1 // pred_check
      _
    $region23: #{tpu_custom_call.1} parent=1 // pred_check_branch
      %50 = sbr.rel (0) target = $region25
    $region24: #{tpu_custom_call.1} parent=1 // pred_region
      %51 = dma.done [#allocation6], 64
    $region25: #{tpu_custom_call.1} parent=1 // pred_fallthru
      _
    // Predicated region
    $region26: #{tpu_custom_call.1} parent=1 // pred_check
      _
    $region27: #{tpu_custom_call.1} parent=1 // pred_check_branch
      %53 = sbr.rel (0) target = $region29
    $region28: #{tpu_custom_call.1} parent=1 // pred_region
      %54 = dma.done [#allocation6], 8192
    $region29: #{tpu_custom_call.1} parent=1 // pred_fallthru
      _
    %v56 = vld [vmem:[#allocation2] sm:$0xf]
    %v57 = vld [vmem:[#allocation5] sm:$0xf]
    %s58 = scalar_lea.vmem [#allocation7], 256
    %v59 = vld [vmem:[%s58] sm:$0xf]
    %v60 = vld [vmem:[%s58 + $0x4] sm:$0xf]
    %v61 = vld [vmem:[%s58 + $0x8] sm:$0xf]
    %v62 = vld [vmem:[%s58 + $0xc] sm:$0xf]
    %v63 = vld [vmem:[%s58 + $0x10] sm:$0xf]
    %v64 = vld [vmem:[%s58 + $0x14] sm:$0xf]
    %v65 = vld [vmem:[%s58 + $0x18] sm:$0xf]
    %v66 = vld [vmem:[%s58 + $0x1c] sm:$0xf]
    %v67 = vld [vmem:[%s58 + $0x20] sm:$0xf]
    %v68 = vld [vmem:[%s58 + $0x24] sm:$0xf]
    %v69 = vld [vmem:[%s58 + $0x28] sm:$0xf]
    %v70 = vld [vmem:[%s58 + $0x2c] sm:$0xf]
    %v71 = vld [vmem:[%s58 + $0x30] sm:$0xf]
    %v72 = vld [vmem:[%s58 + $0x34] sm:$0xf]
    %v73 = vld [vmem:[%s58 + $0x38] sm:$0xf]
    %v74 = vld [vmem:[%s58 + $0x3c] sm:$0xf]
    %v75 = vld [vmem:[%s3 + $0x4] sm:$0x1]
    %v76 = vlaneseq
    %v77 = vshrl.u32 %v76, 7
    %v78 = vsub.s32 0, %v77
    %v79 = vrot.slane %v75, %v78
    %v96 = vunpack.c.l.b16 %v59
    %v97 = vunpack.c.l.b16 %v60
    %v98 = vunpack.c.l.b16 %v61
    %v99 = vunpack.c.l.b16 %v62
    %v100 = vunpack.c.l.b16 %v63
    %v101 = vunpack.c.l.b16 %v64
    %v102 = vunpack.c.l.b16 %v65
    %v103 = vunpack.c.l.b16 %v66
    %v104 = vunpack.c.l.b16 %v67
    %v105 = vunpack.c.l.b16 %v68
    %v106 = vunpack.c.l.b16 %v69
    %v107 = vunpack.c.l.b16 %v70
    %v108 = vunpack.c.l.b16 %v71
    %v109 = vunpack.c.l.b16 %v72
    %v110 = vunpack.c.l.b16 %v73
    %v111 = vunpack.c.l.b16 %v74
    %v112 = vpack.c.b16 %v97, %v96
    %v113 = vpack.c.b16 %v99, %v98
    %v114 = vpack.c.b16 %v101, %v100
    %v115 = vpack.c.b16 %v103, %v102
    %v116 = vpack.c.b16 %v105, %v104
    %v117 = vpack.c.b16 %v107, %v106
    %v118 = vpack.c.b16 %v109, %v108
    %v119 = vpack.c.b16 %v111, %v110
    %128 = vmatprep.subr.bf16.mxu0 0
    %129 = vmatpush1.bf16.msra.mxu0 %v112
    %130 = vmatprep.subr.bf16.mxu0 0
    %131 = vmatpush1.bf16.msra.mxu0 %v113
    %132 = vmatprep.subr.bf16.mxu0 0
    %133 = vmatpush1.bf16.msra.mxu0 %v114
    %134 = vmatprep.subr.bf16.mxu0 0
    %135 = vmatpush1.bf16.msra.mxu0 %v115
    %136 = vmatprep.subr.bf16.mxu0 0
    %137 = vmatpush1.bf16.msra.mxu0 %v116
    %138 = vmatprep.subr.bf16.mxu0 0
    %139 = vmatpush1.bf16.msra.mxu0 %v117
    %140 = vmatprep.subr.bf16.mxu0 0
    %141 = vmatpush1.bf16.msra.mxu0 %v118
    %142 = vmatprep.subr.bf16.mxu0 0
    %143 = vmatpush1.bf16.msra.mxu0 %v119
    %144 = vmatprep.subr.bf16.mxu0 0
    %145 = vmatpush1.bf16.msra.mxu0 0
    %146 = vmatprep.subr.bf16.mxu0 0
    %147 = vmatpush1.bf16.msra.mxu0 0
    %148 = vmatprep.subr.bf16.mxu0 0
    %149 = vmatpush1.bf16.msra.mxu0 0
    %150 = vmatprep.subr.bf16.mxu0 0
    %151 = vmatpush1.bf16.msra.mxu0 0
    %152 = vmatprep.subr.bf16.mxu0 0
    %153 = vmatpush1.bf16.msra.mxu0 0
    %154 = vmatprep.subr.bf16.mxu0 0
    %155 = vmatpush1.bf16.msra.mxu0 0
    %156 = vmatprep.subr.bf16.mxu0 0
    %157 = vmatpush1.bf16.msra.mxu0 0
    %158 = vmatprep.subr.bf16.mxu0 0
    %159 = vmatpush1.bf16.msra.mxu0 0
    %160 = vmatprep.mubr.bf16.mxu0 0
    %161 = vmatmul.mubr.bf16.gmra.mrb[0].mxu0 %v57
    %v162 = vpop.f32.mrb[0].mxu0
    %v163 = vadd.f32 %v79, %v162
    %v164 = vpop.f32.mrb[0].mxu0
    %v165 = vpop.f32.mrb[0].mxu0
    %v166 = vpop.f32.mrb[0].mxu0
    %167 = vdwg.mxu0
    %v168 = vld [vmem:[#allocation7] sm:$0xf]
    %v169 = vld [vmem:[#allocation7 + $0x4] sm:$0xf]
    %v170 = vld [vmem:[#allocation7 + $0x8] sm:$0xf]
    %v171 = vld [vmem:[#allocation7 + $0xc] sm:$0xf]
    %v172 = vld [vmem:[#allocation7 + $0x10] sm:$0xf]
    %v173 = vld [vmem:[#allocation7 + $0x14] sm:$0xf]
    %v174 = vld [vmem:[#allocation7 + $0x18] sm:$0xf]
    %v175 = vld [vmem:[#allocation7 + $0x1c] sm:$0xf]
    %v176 = vld [vmem:[#allocation7 + $0x20] sm:$0xf]
    %v177 = vld [vmem:[#allocation7 + $0x24] sm:$0xf]
    %v178 = vld [vmem:[#allocation7 + $0x28] sm:$0xf]
    %v179 = vld [vmem:[#allocation7 + $0x2c] sm:$0xf]
    %v180 = vld [vmem:[#allocation7 + $0x30] sm:$0xf]
    %v181 = vld [vmem:[#allocation7 + $0x34] sm:$0xf]
    %v182 = vld [vmem:[#allocation7 + $0x38] sm:$0xf]
    %v183 = vld [vmem:[#allocation7 + $0x3c] sm:$0xf]
    %v184 = vld [vmem:[%s3] sm:$0x1]
    %v185 = vlaneseq
    %v186 = vshrl.u32 %v185, 7
    %v187 = vsub.s32 0, %v186
    %v188 = vrot.slane %v184, %v187
    %v205 = vunpack.c.l.b16 %v168
    %v206 = vunpack.c.l.b16 %v169
    %v207 = vunpack.c.l.b16 %v170
    %v208 = vunpack.c.l.b16 %v171
    %v209 = vunpack.c.l.b16 %v172
    %v210 = vunpack.c.l.b16 %v173
    %v211 = vunpack.c.l.b16 %v174
    %v212 = vunpack.c.l.b16 %v175
    %v213 = vunpack.c.l.b16 %v176
    %v214 = vunpack.c.l.b16 %v177
    %v215 = vunpack.c.l.b16 %v178
    %v216 = vunpack.c.l.b16 %v179
    %v217 = vunpack.c.l.b16 %v180
    %v218 = vunpack.c.l.b16 %v181
    %v219 = vunpack.c.l.b16 %v182
    %v220 = vunpack.c.l.b16 %v183
    %v221 = vpack.c.b16 %v206, %v205
    %v222 = vpack.c.b16 %v208, %v207
    %v223 = vpack.c.b16 %v210, %v209
    %v224 = vpack.c.b16 %v212, %v211
    %v225 = vpack.c.b16 %v214, %v213
    %v226 = vpack.c.b16 %v216, %v215
    %v227 = vpack.c.b16 %v218, %v217
    %v228 = vpack.c.b16 %v220, %v219
    %237 = vmatprep.subr.bf16.mxu0 0
    %238 = vmatpush1.bf16.msra.mxu0 %v221
    %239 = vmatprep.subr.bf16.mxu0 0
    %240 = vmatpush1.bf16.msra.mxu0 %v222
    %241 = vmatprep.subr.bf16.mxu0 0
    %242 = vmatpush1.bf16.msra.mxu0 %v223
    %243 = vmatprep.subr.bf16.mxu0 0
    %244 = vmatpush1.bf16.msra.mxu0 %v224
    %245 = vmatprep.subr.bf16.mxu0 0
    %246 = vmatpush1.bf16.msra.mxu0 %v225
    %247 = vmatprep.subr.bf16.mxu0 0
    %248 = vmatpush1.bf16.msra.mxu0 %v226
    %249 = vmatprep.subr.bf16.mxu0 0
    %250 = vmatpush1.bf16.msra.mxu0 %v227
    %251 = vmatprep.subr.bf16.mxu0 0
    %252 = vmatpush1.bf16.msra.mxu0 %v228
    %253 = vmatprep.subr.bf16.mxu0 0
    %254 = vmatpush1.bf16.msra.mxu0 0
    %255 = vmatprep.subr.bf16.mxu0 0
    %256 = vmatpush1.bf16.msra.mxu0 0
    %257 = vmatprep.subr.bf16.mxu0 0
    %258 = vmatpush1.bf16.msra.mxu0 0
    %259 = vmatprep.subr.bf16.mxu0 0
    %260 = vmatpush1.bf16.msra.mxu0 0
    %261 = vmatprep.subr.bf16.mxu0 0
    %262 = vmatpush1.bf16.msra.mxu0 0
    %263 = vmatprep.subr.bf16.mxu0 0
    %264 = vmatpush1.bf16.msra.mxu0 0
    %265 = vmatprep.subr.bf16.mxu0 0
    %266 = vmatpush1.bf16.msra.mxu0 0
    %267 = vmatprep.subr.bf16.mxu0 0
    %268 = vmatpush1.bf16.msra.mxu0 0
    %269 = vmatprep.mubr.bf16.mxu0 0
    %270 = vmatmul.mubr.bf16.gmra.mrb[0].mxu0 %v56
    %v271 = vpop.f32.mrb[0].mxu0
    %v272 = vadd.f32 %v188, %v271
    %v273 = vpop.f32.mrb[0].mxu0
    %v274 = vpop.f32.mrb[0].mxu0
    %v275 = vpop.f32.mrb[0].mxu0
    %276 = vdwg.mxu0
    %v277 = vpack.c.bf16 %v272, %v272
    %s278 = scalar_lea.vmem [#allocation7], 64
    %v279 = vld [vmem:[%s278] sm:$0xf]
    %v280 = vld [vmem:[%s278 + $0x4] sm:$0xf]
    %v281 = vld [vmem:[%s278 + $0x8] sm:$0xf]
    %v282 = vld [vmem:[%s278 + $0xc] sm:$0xf]
    %v283 = vld [vmem:[%s278 + $0x10] sm:$0xf]
    %v284 = vld [vmem:[%s278 + $0x14] sm:$0xf]
    %v285 = vld [vmem:[%s278 + $0x18] sm:$0xf]
    %v286 = vld [vmem:[%s278 + $0x1c] sm:$0xf]
    %v287 = vld [vmem:[%s278 + $0x20] sm:$0xf]
    %v288 = vld [vmem:[%s278 + $0x24] sm:$0xf]
    %v289 = vld [vmem:[%s278 + $0x28] sm:$0xf]
    %v290 = vld [vmem:[%s278 + $0x2c] sm:$0xf]
    %v291 = vld [vmem:[%s278 + $0x30] sm:$0xf]
    %v292 = vld [vmem:[%s278 + $0x34] sm:$0xf]
    %v293 = vld [vmem:[%s278 + $0x38] sm:$0xf]
    %v294 = vld [vmem:[%s278 + $0x3c] sm:$0xf]
    %v295 = vld [vmem:[%s3 + $0x1] sm:$0x1]
    %v296 = vlaneseq
    %v297 = vshrl.u32 %v296, 7
    %v298 = vsub.s32 0, %v297
    %v299 = vrot.slane %v295, %v298
    %v316 = vunpack.c.l.b16 %v279
    %v317 = vunpack.c.l.b16 %v280
    %v318 = vunpack.c.l.b16 %v281
    %v319 = vunpack.c.l.b16 %v282
    %v320 = vunpack.c.l.b16 %v283
    %v321 = vunpack.c.l.b16 %v284
    %v322 = vunpack.c.l.b16 %v285
    %v323 = vunpack.c.l.b16 %v286
    %v324 = vunpack.c.l.b16 %v287
    %v325 = vunpack.c.l.b16 %v288
    %v326 = vunpack.c.l.b16 %v289
    %v327 = vunpack.c.l.b16 %v290
    %v328 = vunpack.c.l.b16 %v291
    %v329 = vunpack.c.l.b16 %v292
    %v330 = vunpack.c.l.b16 %v293
    %v331 = vunpack.c.l.b16 %v294
    %v332 = vpack.c.b16 %v317, %v316
    %v333 = vpack.c.b16 %v319, %v318
    %v334 = vpack.c.b16 %v321, %v320
    %v335 = vpack.c.b16 %v323, %v322
    %v336 = vpack.c.b16 %v325, %v324
    %v337 = vpack.c.b16 %v327, %v326
    %v338 = vpack.c.b16 %v329, %v328
    %v339 = vpack.c.b16 %v331, %v330
    %348 = vmatprep.subr.bf16.mxu0 0
    %349 = vmatpush1.bf16.msra.mxu0 %v332
    %350 = vmatprep.subr.bf16.mxu0 0
    %351 = vmatpush1.bf16.msra.mxu0 %v333
    %352 = vmatprep.subr.bf16.mxu0 0
    %353 = vmatpush1.bf16.msra.mxu0 %v334
    %354 = vmatprep.subr.bf16.mxu0 0
    %355 = vmatpush1.bf16.msra.mxu0 %v335
    %356 = vmatprep.subr.bf16.mxu0 0
    %357 = vmatpush1.bf16.msra.mxu0 %v336
    %358 = vmatprep.subr.bf16.mxu0 0
    %359 = vmatpush1.bf16.msra.mxu0 %v337
    %360 = vmatprep.subr.bf16.mxu0 0
    %361 = vmatpush1.bf16.msra.mxu0 %v338
    %362 = vmatprep.subr.bf16.mxu0 0
    %363 = vmatpush1.bf16.msra.mxu0 %v339
    %364 = vmatprep.subr.bf16.mxu0 0
    %365 = vmatpush1.bf16.msra.mxu0 0
    %366 = vmatprep.subr.bf16.mxu0 0
    %367 = vmatpush1.bf16.msra.mxu0 0
    %368 = vmatprep.subr.bf16.mxu0 0
    %369 = vmatpush1.bf16.msra.mxu0 0
    %370 = vmatprep.subr.bf16.mxu0 0
    %371 = vmatpush1.bf16.msra.mxu0 0
    %372 = vmatprep.subr.bf16.mxu0 0
    %373 = vmatpush1.bf16.msra.mxu0 0
    %374 = vmatprep.subr.bf16.mxu0 0
    %375 = vmatpush1.bf16.msra.mxu0 0
    %376 = vmatprep.subr.bf16.mxu0 0
    %377 = vmatpush1.bf16.msra.mxu0 0
    %378 = vmatprep.subr.bf16.mxu0 0
    %379 = vmatpush1.bf16.msra.mxu0 0
    %380 = vmatprep.mubr.bf16.mxu0 0
    %381 = vmatmul.mubr.bf16.gmra.mrb[0].mxu0 %v277
    %v382 = vpop.f32.mrb[0].mxu0
    %v383 = vadd.f32 %v299, %v382
    %v384 = vpop.f32.mrb[0].mxu0
    %v385 = vpop.f32.mrb[0].mxu0
    %v386 = vpop.f32.mrb[0].mxu0
    %387 = vdwg.mxu0
    %vm388 = vcmp.ge.f32.partialorder %v383, 0.0
    %v389 = vmul.f32 %v383, 0.2
    %v390 = vsel %vm388, %v383, %v389
    %v391 = vpack.c.bf16 %v390, %v390
    %s392 = scalar_lea.vmem [#allocation7], 128
    %v393 = vld [vmem:[%s392] sm:$0xf]
    %v394 = vld [vmem:[%s392 + $0x4] sm:$0xf]
    %v395 = vld [vmem:[%s392 + $0x8] sm:$0xf]
    %v396 = vld [vmem:[%s392 + $0xc] sm:$0xf]
    %v397 = vld [vmem:[%s392 + $0x10] sm:$0xf]
    %v398 = vld [vmem:[%s392 + $0x14] sm:$0xf]
    %v399 = vld [vmem:[%s392 + $0x18] sm:$0xf]
    %v400 = vld [vmem:[%s392 + $0x1c] sm:$0xf]
    %v401 = vld [vmem:[%s392 + $0x20] sm:$0xf]
    %v402 = vld [vmem:[%s392 + $0x24] sm:$0xf]
    %v403 = vld [vmem:[%s392 + $0x28] sm:$0xf]
    %v404 = vld [vmem:[%s392 + $0x2c] sm:$0xf]
    %v405 = vld [vmem:[%s392 + $0x30] sm:$0xf]
    %v406 = vld [vmem:[%s392 + $0x34] sm:$0xf]
    %v407 = vld [vmem:[%s392 + $0x38] sm:$0xf]
    %v408 = vld [vmem:[%s392 + $0x3c] sm:$0xf]
    %v409 = vld [vmem:[%s3 + $0x2] sm:$0x1]
    %v410 = vlaneseq
    %v411 = vshrl.u32 %v410, 7
    %v412 = vsub.s32 0, %v411
    %v413 = vrot.slane %v409, %v412
    %v430 = vunpack.c.l.b16 %v393
    %v431 = vunpack.c.l.b16 %v394
    %v432 = vunpack.c.l.b16 %v395
    %v433 = vunpack.c.l.b16 %v396
    %v434 = vunpack.c.l.b16 %v397
    %v435 = vunpack.c.l.b16 %v398
    %v436 = vunpack.c.l.b16 %v399
    %v437 = vunpack.c.l.b16 %v400
    %v438 = vunpack.c.l.b16 %v401
    %v439 = vunpack.c.l.b16 %v402
    %v440 = vunpack.c.l.b16 %v403
    %v441 = vunpack.c.l.b16 %v404
    %v442 = vunpack.c.l.b16 %v405
    %v443 = vunpack.c.l.b16 %v406
    %v444 = vunpack.c.l.b16 %v407
    %v445 = vunpack.c.l.b16 %v408
    %v446 = vpack.c.b16 %v431, %v430
    %v447 = vpack.c.b16 %v433, %v432
    %v448 = vpack.c.b16 %v435, %v434
    %v449 = vpack.c.b16 %v437, %v436
    %v450 = vpack.c.b16 %v439, %v438
    %v451 = vpack.c.b16 %v441, %v440
    %v452 = vpack.c.b16 %v443, %v442
    %v453 = vpack.c.b16 %v445, %v444
    %462 = vmatprep.subr.bf16.mxu0 0
    %463 = vmatpush1.bf16.msra.mxu0 %v446
    %464 = vmatprep.subr.bf16.mxu0 0
    %465 = vmatpush1.bf16.msra.mxu0 %v447
    %466 = vmatprep.subr.bf16.mxu0 0
    %467 = vmatpush1.bf16.msra.mxu0 %v448
    %468 = vmatprep.subr.bf16.mxu0 0
    %469 = vmatpush1.bf16.msra.mxu0 %v449
    %470 = vmatprep.subr.bf16.mxu0 0
    %471 = vmatpush1.bf16.msra.mxu0 %v450
    %472 = vmatprep.subr.bf16.mxu0 0
    %473 = vmatpush1.bf16.msra.mxu0 %v451
    %474 = vmatprep.subr.bf16.mxu0 0
    %475 = vmatpush1.bf16.msra.mxu0 %v452
    %476 = vmatprep.subr.bf16.mxu0 0
    %477 = vmatpush1.bf16.msra.mxu0 %v453
    %478 = vmatprep.subr.bf16.mxu0 0
    %479 = vmatpush1.bf16.msra.mxu0 0
    %480 = vmatprep.subr.bf16.mxu0 0
    %481 = vmatpush1.bf16.msra.mxu0 0
    %482 = vmatprep.subr.bf16.mxu0 0
    %483 = vmatpush1.bf16.msra.mxu0 0
    %484 = vmatprep.subr.bf16.mxu0 0
    %485 = vmatpush1.bf16.msra.mxu0 0
    %486 = vmatprep.subr.bf16.mxu0 0
    %487 = vmatpush1.bf16.msra.mxu0 0
    %488 = vmatprep.subr.bf16.mxu0 0
    %489 = vmatpush1.bf16.msra.mxu0 0
    %490 = vmatprep.subr.bf16.mxu0 0
    %491 = vmatpush1.bf16.msra.mxu0 0
    %492 = vmatprep.subr.bf16.mxu0 0
    %493 = vmatpush1.bf16.msra.mxu0 0
    %494 = vmatprep.mubr.bf16.mxu0 0
    %495 = vmatmul.mubr.bf16.gmra.mrb[0].mxu0 %v391
    %v496 = vpop.f32.mrb[0].mxu0
    %v497 = vadd.f32 %v413, %v496
    %v498 = vpop.f32.mrb[0].mxu0
    %v499 = vpop.f32.mrb[0].mxu0
    %v500 = vpop.f32.mrb[0].mxu0
    %501 = vdwg.mxu0
    %v502 = vadd.f32 %v272, %v497
    %v503 = vpack.c.bf16 %v502, %v502
    %s504 = scalar_lea.vmem [#allocation7], 192
    %v505 = vld [vmem:[%s504] sm:$0xf]
    %v506 = vld [vmem:[%s504 + $0x4] sm:$0xf]
    %v507 = vld [vmem:[%s504 + $0x8] sm:$0xf]
    %v508 = vld [vmem:[%s504 + $0xc] sm:$0xf]
    %v509 = vld [vmem:[%s504 + $0x10] sm:$0xf]
    %v510 = vld [vmem:[%s504 + $0x14] sm:$0xf]
    %v511 = vld [vmem:[%s504 + $0x18] sm:$0xf]
    %v512 = vld [vmem:[%s504 + $0x1c] sm:$0xf]
    %v513 = vld [vmem:[%s504 + $0x20] sm:$0xf]
    %v514 = vld [vmem:[%s504 + $0x24] sm:$0xf]
    %v515 = vld [vmem:[%s504 + $0x28] sm:$0xf]
    %v516 = vld [vmem:[%s504 + $0x2c] sm:$0xf]
    %v517 = vld [vmem:[%s504 + $0x30] sm:$0xf]
    %v518 = vld [vmem:[%s504 + $0x34] sm:$0xf]
    %v519 = vld [vmem:[%s504 + $0x38] sm:$0xf]
    %v520 = vld [vmem:[%s504 + $0x3c] sm:$0xf]
    %v521 = vld [vmem:[%s3 + $0x3] sm:$0x1]
    %v522 = vlaneseq
    %v523 = vshrl.u32 %v522, 7
    %v524 = vsub.s32 0, %v523
    %v525 = vrot.slane %v521, %v524
    %v542 = vunpack.c.l.b16 %v505
    %v543 = vunpack.c.l.b16 %v506
    %v544 = vunpack.c.l.b16 %v507
    %v545 = vunpack.c.l.b16 %v508
    %v546 = vunpack.c.l.b16 %v509
    %v547 = vunpack.c.l.b16 %v510
    %v548 = vunpack.c.l.b16 %v511
    %v549 = vunpack.c.l.b16 %v512
    %v550 = vunpack.c.l.b16 %v513
    %v551 = vunpack.c.l.b16 %v514
    %v552 = vunpack.c.l.b16 %v515
    %v553 = vunpack.c.l.b16 %v516
    %v554 = vunpack.c.l.b16 %v517
    %v555 = vunpack.c.l.b16 %v518
    %v556 = vunpack.c.l.b16 %v519
    %v557 = vunpack.c.l.b16 %v520
    %v558 = vpack.c.b16 %v543, %v542
    %v559 = vpack.c.b16 %v545, %v544
    %v560 = vpack.c.b16 %v547, %v546
    %v561 = vpack.c.b16 %v549, %v548
    %v562 = vpack.c.b16 %v551, %v550
    %v563 = vpack.c.b16 %v553, %v552
    %v564 = vpack.c.b16 %v555, %v554
    %v565 = vpack.c.b16 %v557, %v556
    %574 = vmatprep.subr.bf16.mxu0 0
    %575 = vmatpush1.bf16.msra.mxu0 %v558
    %576 = vmatprep.subr.bf16.mxu0 0
    %577 = vmatpush1.bf16.msra.mxu0 %v559
    %578 = vmatprep.subr.bf16.mxu0 0
    %579 = vmatpush1.bf16.msra.mxu0 %v560
    %580 = vmatprep.subr.bf16.mxu0 0
    %581 = vmatpush1.bf16.msra.mxu0 %v561
    %582 = vmatprep.subr.bf16.mxu0 0
    %583 = vmatpush1.bf16.msra.mxu0 %v562
    %584 = vmatprep.subr.bf16.mxu0 0
    %585 = vmatpush1.bf16.msra.mxu0 %v563
    %586 = vmatprep.subr.bf16.mxu0 0
    %587 = vmatpush1.bf16.msra.mxu0 %v564
    %588 = vmatprep.subr.bf16.mxu0 0
    %589 = vmatpush1.bf16.msra.mxu0 %v565
    %590 = vmatprep.subr.bf16.mxu0 0
    %591 = vmatpush1.bf16.msra.mxu0 0
    %592 = vmatprep.subr.bf16.mxu0 0
    %593 = vmatpush1.bf16.msra.mxu0 0
    %594 = vmatprep.subr.bf16.mxu0 0
    %595 = vmatpush1.bf16.msra.mxu0 0
    %596 = vmatprep.subr.bf16.mxu0 0
    %597 = vmatpush1.bf16.msra.mxu0 0
    %598 = vmatprep.subr.bf16.mxu0 0
    %599 = vmatpush1.bf16.msra.mxu0 0
    %600 = vmatprep.subr.bf16.mxu0 0
    %601 = vmatpush1.bf16.msra.mxu0 0
    %602 = vmatprep.subr.bf16.mxu0 0
    %603 = vmatpush1.bf16.msra.mxu0 0
    %604 = vmatprep.subr.bf16.mxu0 0
    %605 = vmatpush1.bf16.msra.mxu0 0
    %606 = vmatprep.mubr.bf16.mxu0 0
    %607 = vmatmul.mubr.bf16.gmra.mrb[0].mxu0 %v503
    %v608 = vpop.f32.mrb[0].mxu0
    %v609 = vadd.f32 %v525, %v608
    %v610 = vpop.f32.mrb[0].mxu0
    %v611 = vpop.f32.mrb[0].mxu0
    %v612 = vpop.f32.mrb[0].mxu0
    %613 = vdwg.mxu0
    %v614 = vadd.f32 %v609, %v163
    %v615 = vpack.c.bf16 %v614, %v614
    %s616 = scalar_lea.vmem [#allocation7], 320
    %v617 = vld [vmem:[%s616] sm:$0xf]
    %v618 = vld [vmem:[%s616 + $0x4] sm:$0xf]
    %v619 = vld [vmem:[%s616 + $0x8] sm:$0xf]
    %v620 = vld [vmem:[%s616 + $0xc] sm:$0xf]
    %v621 = vld [vmem:[%s616 + $0x10] sm:$0xf]
    %v622 = vld [vmem:[%s616 + $0x14] sm:$0xf]
    %v623 = vld [vmem:[%s616 + $0x18] sm:$0xf]
    %v624 = vld [vmem:[%s616 + $0x1c] sm:$0xf]
    %v625 = vld [vmem:[%s616 + $0x20] sm:$0xf]
    %v626 = vld [vmem:[%s616 + $0x24] sm:$0xf]
    %v627 = vld [vmem:[%s616 + $0x28] sm:$0xf]
    %v628 = vld [vmem:[%s616 + $0x2c] sm:$0xf]
    %v629 = vld [vmem:[%s616 + $0x30] sm:$0xf]
    %v630 = vld [vmem:[%s616 + $0x34] sm:$0xf]
    %v631 = vld [vmem:[%s616 + $0x38] sm:$0xf]
    %v632 = vld [vmem:[%s616 + $0x3c] sm:$0xf]
    %v633 = vld [vmem:[%s3 + $0x5] sm:$0x1]
    %v634 = vlaneseq
    %v635 = vshrl.u32 %v634, 7
    %v636 = vsub.s32 0, %v635
    %v637 = vrot.slane %v633, %v636
    %v654 = vunpack.c.l.b16 %v617
    %v655 = vunpack.c.l.b16 %v618
    %v656 = vunpack.c.l.b16 %v619
    %v657 = vunpack.c.l.b16 %v620
    %v658 = vunpack.c.l.b16 %v621
    %v659 = vunpack.c.l.b16 %v622
    %v660 = vunpack.c.l.b16 %v623
    %v661 = vunpack.c.l.b16 %v624
    %v662 = vunpack.c.l.b16 %v625
    %v663 = vunpack.c.l.b16 %v626
    %v664 = vunpack.c.l.b16 %v627
    %v665 = vunpack.c.l.b16 %v628
    %v666 = vunpack.c.l.b16 %v629
    %v667 = vunpack.c.l.b16 %v630
    %v668 = vunpack.c.l.b16 %v631
    %v669 = vunpack.c.l.b16 %v632
    %v670 = vpack.c.b16 %v655, %v654
    %v671 = vpack.c.b16 %v657, %v656
    %v672 = vpack.c.b16 %v659, %v658
    %v673 = vpack.c.b16 %v661, %v660
    %v674 = vpack.c.b16 %v663, %v662
    %v675 = vpack.c.b16 %v665, %v664
    %v676 = vpack.c.b16 %v667, %v666
    %v677 = vpack.c.b16 %v669, %v668
    %686 = vmatprep.subr.bf16.mxu0 0
    %687 = vmatpush1.bf16.msra.mxu0 %v670
    %688 = vmatprep.subr.bf16.mxu0 0
    %689 = vmatpush1.bf16.msra.mxu0 %v671
    %690 = vmatprep.subr.bf16.mxu0 0
    %691 = vmatpush1.bf16.msra.mxu0 %v672
    %692 = vmatprep.subr.bf16.mxu0 0
    %693 = vmatpush1.bf16.msra.mxu0 %v673
    %694 = vmatprep.subr.bf16.mxu0 0
    %695 = vmatpush1.bf16.msra.mxu0 %v674
    %696 = vmatprep.subr.bf16.mxu0 0
    %697 = vmatpush1.bf16.msra.mxu0 %v675
    %698 = vmatprep.subr.bf16.mxu0 0
    %699 = vmatpush1.bf16.msra.mxu0 %v676
    %700 = vmatprep.subr.bf16.mxu0 0
    %701 = vmatpush1.bf16.msra.mxu0 %v677
    %702 = vmatprep.subr.bf16.mxu0 0
    %703 = vmatpush1.bf16.msra.mxu0 0
    %704 = vmatprep.subr.bf16.mxu0 0
    %705 = vmatpush1.bf16.msra.mxu0 0
    %706 = vmatprep.subr.bf16.mxu0 0
    %707 = vmatpush1.bf16.msra.mxu0 0
    %708 = vmatprep.subr.bf16.mxu0 0
    %709 = vmatpush1.bf16.msra.mxu0 0
    %710 = vmatprep.subr.bf16.mxu0 0
    %711 = vmatpush1.bf16.msra.mxu0 0
    %712 = vmatprep.subr.bf16.mxu0 0
    %713 = vmatpush1.bf16.msra.mxu0 0
    %714 = vmatprep.subr.bf16.mxu0 0
    %715 = vmatpush1.bf16.msra.mxu0 0
    %716 = vmatprep.subr.bf16.mxu0 0
    %717 = vmatpush1.bf16.msra.mxu0 0
    %718 = vmatprep.mubr.bf16.mxu0 0
    %719 = vmatmul.mubr.bf16.gmra.mrb[0].mxu0 %v615
    %v720 = vpop.f32.mrb[0].mxu0
    %v721 = vadd.f32 %v637, %v720
    %v722 = vpop.f32.mrb[0].mxu0
    %v723 = vpop.f32.mrb[0].mxu0
    %v724 = vpop.f32.mrb[0].mxu0
    %725 = vdwg.mxu0
    %vm726 = vcmp.ge.f32.partialorder %v721, 0.0
    %v727 = vmul.f32 %v721, 0.2
    %v728 = vsel %vm726, %v721, %v727
    %v729 = vpack.c.bf16 %v728, %v728
    %s730 = scalar_lea.vmem [#allocation7], 384
    %v731 = vld [vmem:[%s730] sm:$0xf]
    %v732 = vld [vmem:[%s730 + $0x4] sm:$0xf]
    %v733 = vld [vmem:[%s730 + $0x8] sm:$0xf]
    %v734 = vld [vmem:[%s730 + $0xc] sm:$0xf]
    %v735 = vld [vmem:[%s730 + $0x10] sm:$0xf]
    %v736 = vld [vmem:[%s730 + $0x14] sm:$0xf]
    %v737 = vld [vmem:[%s730 + $0x18] sm:$0xf]
    %v738 = vld [vmem:[%s730 + $0x1c] sm:$0xf]
    %v739 = vld [vmem:[%s730 + $0x20] sm:$0xf]
    %v740 = vld [vmem:[%s730 + $0x24] sm:$0xf]
    %v741 = vld [vmem:[%s730 + $0x28] sm:$0xf]
    %v742 = vld [vmem:[%s730 + $0x2c] sm:$0xf]
    %v743 = vld [vmem:[%s730 + $0x30] sm:$0xf]
    %v744 = vld [vmem:[%s730 + $0x34] sm:$0xf]
    %v745 = vld [vmem:[%s730 + $0x38] sm:$0xf]
    %v746 = vld [vmem:[%s730 + $0x3c] sm:$0xf]
    %v747 = vld [vmem:[%s3 + $0x6] sm:$0x1]
    %v748 = vlaneseq
    %v749 = vshrl.u32 %v748, 7
    %v750 = vsub.s32 0, %v749
    %v751 = vrot.slane %v747, %v750
    %v768 = vunpack.c.l.b16 %v731
    %v769 = vunpack.c.l.b16 %v732
    %v770 = vunpack.c.l.b16 %v733
    %v771 = vunpack.c.l.b16 %v734
    %v772 = vunpack.c.l.b16 %v735
    %v773 = vunpack.c.l.b16 %v736
    %v774 = vunpack.c.l.b16 %v737
    %v775 = vunpack.c.l.b16 %v738
    %v776 = vunpack.c.l.b16 %v739
    %v777 = vunpack.c.l.b16 %v740
    %v778 = vunpack.c.l.b16 %v741
    %v779 = vunpack.c.l.b16 %v742
    %v780 = vunpack.c.l.b16 %v743
    %v781 = vunpack.c.l.b16 %v744
    %v782 = vunpack.c.l.b16 %v745
    %v783 = vunpack.c.l.b16 %v746
    %v784 = vpack.c.b16 %v769, %v768
    %v785 = vpack.c.b16 %v771, %v770
    %v786 = vpack.c.b16 %v773, %v772
    %v787 = vpack.c.b16 %v775, %v774
    %v788 = vpack.c.b16 %v777, %v776
    %v789 = vpack.c.b16 %v779, %v778
    %v790 = vpack.c.b16 %v781, %v780
    %v791 = vpack.c.b16 %v783, %v782
    %800 = vmatprep.subr.bf16.mxu0 0
    %801 = vmatpush1.bf16.msra.mxu0 %v784
    %802 = vmatprep.subr.bf16.mxu0 0
    %803 = vmatpush1.bf16.msra.mxu0 %v785
    %804 = vmatprep.subr.bf16.mxu0 0
    %805 = vmatpush1.bf16.msra.mxu0 %v786
    %806 = vmatprep.subr.bf16.mxu0 0
    %807 = vmatpush1.bf16.msra.mxu0 %v787
    %808 = vmatprep.subr.bf16.mxu0 0
    %809 = vmatpush1.bf16.msra.mxu0 %v788
    %810 = vmatprep.subr.bf16.mxu0 0
    %811 = vmatpush1.bf16.msra.mxu0 %v789
    %812 = vmatprep.subr.bf16.mxu0 0
    %813 = vmatpush1.bf16.msra.mxu0 %v790
    %814 = vmatprep.subr.bf16.mxu0 0
    %815 = vmatpush1.bf16.msra.mxu0 %v791
    %816 = vmatprep.subr.bf16.mxu0 0
    %817 = vmatpush1.bf16.msra.mxu0 0
    %818 = vmatprep.subr.bf16.mxu0 0
    %819 = vmatpush1.bf16.msra.mxu0 0
    %820 = vmatprep.subr.bf16.mxu0 0
    %821 = vmatpush1.bf16.msra.mxu0 0
    %822 = vmatprep.subr.bf16.mxu0 0
    %823 = vmatpush1.bf16.msra.mxu0 0
    %824 = vmatprep.subr.bf16.mxu0 0
    %825 = vmatpush1.bf16.msra.mxu0 0
    %826 = vmatprep.subr.bf16.mxu0 0
    %827 = vmatpush1.bf16.msra.mxu0 0
    %828 = vmatprep.subr.bf16.mxu0 0
    %829 = vmatpush1.bf16.msra.mxu0 0
    %830 = vmatprep.subr.bf16.mxu0 0
    %831 = vmatpush1.bf16.msra.mxu0 0
    %832 = vmatprep.mubr.bf16.mxu0 0
    %833 = vmatmul.mubr.bf16.gmra.mrb[0].mxu0 %v729
    %v834 = vpop.f32.mrb[0].mxu0
    %v835 = vadd.f32 %v751, %v834
    %v836 = vpop.f32.mrb[0].mxu0
    %v837 = vpop.f32.mrb[0].mxu0
    %v838 = vpop.f32.mrb[0].mxu0
    %839 = vdwg.mxu0
    %v840 = vadd.f32 %v614, %v835
    %v841 = vpack.c.bf16 %v840, %v840
    %842 = vmatprep.subr.bf16.mxu0 0
    %843 = vmatpush1.bf16.msra.mxu0 %v558
    %844 = vmatprep.subr.bf16.mxu0 0
    %845 = vmatpush1.bf16.msra.mxu0 %v559
    %846 = vmatprep.subr.bf16.mxu0 0
    %847 = vmatpush1.bf16.msra.mxu0 %v560
    %848 = vmatprep.subr.bf16.mxu0 0
    %849 = vmatpush1.bf16.msra.mxu0 %v561
    %850 = vmatprep.subr.bf16.mxu0 0
    %851 = vmatpush1.bf16.msra.mxu0 %v562
    %852 = vmatprep.subr.bf16.mxu0 0
    %853 = vmatpush1.bf16.msra.mxu0 %v563
    %854 = vmatprep.subr.bf16.mxu0 0
    %855 = vmatpush1.bf16.msra.mxu0 %v564
    %856 = vmatprep.subr.bf16.mxu0 0
    %857 = vmatpush1.bf16.msra.mxu0 %v565
    %858 = vmatprep.subr.bf16.mxu0 0
    %859 = vmatpush1.bf16.msra.mxu0 0
    %860 = vmatprep.subr.bf16.mxu0 0
    %861 = vmatpush1.bf16.msra.mxu0 0
    %862 = vmatprep.subr.bf16.mxu0 0
    %863 = vmatpush1.bf16.msra.mxu0 0
    %864 = vmatprep.subr.bf16.mxu0 0
    %865 = vmatpush1.bf16.msra.mxu0 0
    %866 = vmatprep.subr.bf16.mxu0 0
    %867 = vmatpush1.bf16.msra.mxu0 0
    %868 = vmatprep.subr.bf16.mxu0 0
    %869 = vmatpush1.bf16.msra.mxu0 0
    %870 = vmatprep.subr.bf16.mxu0 0
    %871 = vmatpush1.bf16.msra.mxu0 0
    %872 = vmatprep.subr.bf16.mxu0 0
    %873 = vmatpush1.bf16.msra.mxu0 0
    %874 = vmatprep.mubr.bf16.mxu0 0
    %875 = vmatmul.mubr.bf16.gmra.mrb[0].mxu0 %v841
    %v876 = vpop.f32.mrb[0].mxu0
    %v877 = vadd.f32 %v525, %v876
    %v878 = vpop.f32.mrb[0].mxu0
    %v879 = vpop.f32.mrb[0].mxu0
    %v880 = vpop.f32.mrb[0].mxu0
    %881 = vdwg.mxu0
    %v882 = vadd.f32 %v877, %v163
    %v883 = vpack.c.bf16 %v882, %v882
    %884 = vmatprep.subr.bf16.mxu0 0
    %885 = vmatpush1.bf16.msra.mxu0 %v670
    %886 = vmatprep.subr.bf16.mxu0 0
    %887 = vmatpush1.bf16.msra.mxu0 %v671
    %888 = vmatprep.subr.bf16.mxu0 0
    %889 = vmatpush1.bf16.msra.mxu0 %v672
    %890 = vmatprep.subr.bf16.mxu0 0
    %891 = vmatpush1.bf16.msra.mxu0 %v673
    %892 = vmatprep.subr.bf16.mxu0 0
    %893 = vmatpush1.bf16.msra.mxu0 %v674
    %894 = vmatprep.subr.bf16.mxu0 0
    %895 = vmatpush1.bf16.msra.mxu0 %v675
    %896 = vmatprep.subr.bf16.mxu0 0
    %897 = vmatpush1.bf16.msra.mxu0 %v676
    %898 = vmatprep.subr.bf16.mxu0 0
    %899 = vmatpush1.bf16.msra.mxu0 %v677
    %900 = vmatprep.subr.bf16.mxu0 0
    %901 = vmatpush1.bf16.msra.mxu0 0
    %902 = vmatprep.subr.bf16.mxu0 0
    %903 = vmatpush1.bf16.msra.mxu0 0
    %904 = vmatprep.subr.bf16.mxu0 0
    %905 = vmatpush1.bf16.msra.mxu0 0
    %906 = vmatprep.subr.bf16.mxu0 0
    %907 = vmatpush1.bf16.msra.mxu0 0
    %908 = vmatprep.subr.bf16.mxu0 0
    %909 = vmatpush1.bf16.msra.mxu0 0
    %910 = vmatprep.subr.bf16.mxu0 0
    %911 = vmatpush1.bf16.msra.mxu0 0
    %912 = vmatprep.subr.bf16.mxu0 0
    %913 = vmatpush1.bf16.msra.mxu0 0
    %914 = vmatprep.subr.bf16.mxu0 0
    %915 = vmatpush1.bf16.msra.mxu0 0
    %916 = vmatprep.mubr.bf16.mxu0 0
    %917 = vmatmul.mubr.bf16.gmra.mrb[0].mxu0 %v883
    %v918 = vpop.f32.mrb[0].mxu0
    %v919 = vadd.f32 %v637, %v918
    %v920 = vpop.f32.mrb[0].mxu0
    %v921 = vpop.f32.mrb[0].mxu0
    %v922 = vpop.f32.mrb[0].mxu0
    %923 = vdwg.mxu0
    %vm924 = vcmp.ge.f32.partialorder %v919, 0.0
    %v925 = vmul.f32 %v919, 0.2
    %v926 = vsel %vm924, %v919, %v925
    %v927 = vpack.c.bf16 %v926, %v926
    %928 = vmatprep.subr.bf16.mxu0 0
    %929 = vmatpush1.bf16.msra.mxu0 %v784
    %930 = vmatprep.subr.bf16.mxu0 0
    %931 = vmatpush1.bf16.msra.mxu0 %v785
    %932 = vmatprep.subr.bf16.mxu0 0
    %933 = vmatpush1.bf16.msra.mxu0 %v786
    %934 = vmatprep.subr.bf16.mxu0 0
    %935 = vmatpush1.bf16.msra.mxu0 %v787
    %936 = vmatprep.subr.bf16.mxu0 0
    %937 = vmatpush1.bf16.msra.mxu0 %v788
    %938 = vmatprep.subr.bf16.mxu0 0
    %939 = vmatpush1.bf16.msra.mxu0 %v789
    %940 = vmatprep.subr.bf16.mxu0 0
    %941 = vmatpush1.bf16.msra.mxu0 %v790
    %942 = vmatprep.subr.bf16.mxu0 0
    %943 = vmatpush1.bf16.msra.mxu0 %v791
    %944 = vmatprep.subr.bf16.mxu0 0
    %945 = vmatpush1.bf16.msra.mxu0 0
    %946 = vmatprep.subr.bf16.mxu0 0
    %947 = vmatpush1.bf16.msra.mxu0 0
    %948 = vmatprep.subr.bf16.mxu0 0
    %949 = vmatpush1.bf16.msra.mxu0 0
    %950 = vmatprep.subr.bf16.mxu0 0
    %951 = vmatpush1.bf16.msra.mxu0 0
    %952 = vmatprep.subr.bf16.mxu0 0
    %953 = vmatpush1.bf16.msra.mxu0 0
    %954 = vmatprep.subr.bf16.mxu0 0
    %955 = vmatpush1.bf16.msra.mxu0 0
    %956 = vmatprep.subr.bf16.mxu0 0
    %957 = vmatpush1.bf16.msra.mxu0 0
    %958 = vmatprep.subr.bf16.mxu0 0
    %959 = vmatpush1.bf16.msra.mxu0 0
    %960 = vmatprep.mubr.bf16.mxu0 0
    %961 = vmatmul.mubr.bf16.gmra.mrb[0].mxu0 %v927
    %v962 = vpop.f32.mrb[0].mxu0
    %v963 = vadd.f32 %v751, %v962
    %v964 = vpop.f32.mrb[0].mxu0
    %v965 = vpop.f32.mrb[0].mxu0
    %v966 = vpop.f32.mrb[0].mxu0
    %967 = vdwg.mxu0
    %v968 = vadd.f32 %v882, %v963
    %vm969 = vcmp.ge.f32.partialorder %v968, 0.0
    %v970 = vmul.f32 %v968, 0.5
    %v971 = vsel %vm969, %v968, %v970
    %v972 = vpack.c.bf16 %v971, %v971
    %s973 = scalar_lea.vmem [#allocation7], 448
    %v974 = vld [vmem:[%s973] sm:$0xf]
    %v975 = vld [vmem:[%s973 + $0x4] sm:$0xf]
    %v976 = vld [vmem:[%s973 + $0x8] sm:$0xf]
    %v977 = vld [vmem:[%s973 + $0xc] sm:$0xf]
    %v978 = vld [vmem:[%s973 + $0x10] sm:$0xf]
    %v979 = vld [vmem:[%s973 + $0x14] sm:$0xf]
    %v980 = vld [vmem:[%s973 + $0x18] sm:$0xf]
    %v981 = vld [vmem:[%s973 + $0x1c] sm:$0xf]
    %v982 = vld [vmem:[%s973 + $0x20] sm:$0xf]
    %v983 = vld [vmem:[%s973 + $0x24] sm:$0xf]
    %v984 = vld [vmem:[%s973 + $0x28] sm:$0xf]
    %v985 = vld [vmem:[%s973 + $0x2c] sm:$0xf]
    %v986 = vld [vmem:[%s973 + $0x30] sm:$0xf]
    %v987 = vld [vmem:[%s973 + $0x34] sm:$0xf]
    %v988 = vld [vmem:[%s973 + $0x38] sm:$0xf]
    %v989 = vld [vmem:[%s973 + $0x3c] sm:$0xf]
    %v990 = vld [vmem:[%s3 + $0x7] sm:$0x1]
    %v991 = vlaneseq
    %v992 = vshrl.u32 %v991, 7
    %v993 = vsub.s32 0, %v992
    %v994 = vrot.slane %v990, %v993
    %v1011 = vunpack.c.l.b16 %v974
    %v1012 = vunpack.c.l.b16 %v975
    %v1013 = vunpack.c.l.b16 %v976
    %v1014 = vunpack.c.l.b16 %v977
    %v1015 = vunpack.c.l.b16 %v978
    %v1016 = vunpack.c.l.b16 %v979
    %v1017 = vunpack.c.l.b16 %v980
    %v1018 = vunpack.c.l.b16 %v981
    %v1019 = vunpack.c.l.b16 %v982
    %v1020 = vunpack.c.l.b16 %v983
    %v1021 = vunpack.c.l.b16 %v984
    %v1022 = vunpack.c.l.b16 %v985
    %v1023 = vunpack.c.l.b16 %v986
    %v1024 = vunpack.c.l.b16 %v987
    %v1025 = vunpack.c.l.b16 %v988
    %v1026 = vunpack.c.l.b16 %v989
    %v1027 = vpack.c.b16 %v1012, %v1011
    %v1028 = vpack.c.b16 %v1014, %v1013
    %v1029 = vpack.c.b16 %v1016, %v1015
    %v1030 = vpack.c.b16 %v1018, %v1017
    %v1031 = vpack.c.b16 %v1020, %v1019
    %v1032 = vpack.c.b16 %v1022, %v1021
    %v1033 = vpack.c.b16 %v1024, %v1023
    %v1034 = vpack.c.b16 %v1026, %v1025
    %1043 = vmatprep.subr.bf16.mxu0 0
    %1044 = vmatpush1.bf16.msra.mxu0 %v1027
    %1045 = vmatprep.subr.bf16.mxu0 0
    %1046 = vmatpush1.bf16.msra.mxu0 %v1028
    %1047 = vmatprep.subr.bf16.mxu0 0
    %1048 = vmatpush1.bf16.msra.mxu0 %v1029
    %1049 = vmatprep.subr.bf16.mxu0 0
    %1050 = vmatpush1.bf16.msra.mxu0 %v1030
    %1051 = vmatprep.subr.bf16.mxu0 0
    %1052 = vmatpush1.bf16.msra.mxu0 %v1031
    %1053 = vmatprep.subr.bf16.mxu0 0
    %1054 = vmatpush1.bf16.msra.mxu0 %v1032
    %1055 = vmatprep.subr.bf16.mxu0 0
    %1056 = vmatpush1.bf16.msra.mxu0 %v1033
    %1057 = vmatprep.subr.bf16.mxu0 0
    %1058 = vmatpush1.bf16.msra.mxu0 %v1034
    %1059 = vmatprep.subr.bf16.mxu0 0
    %1060 = vmatpush1.bf16.msra.mxu0 0
    %1061 = vmatprep.subr.bf16.mxu0 0
    %1062 = vmatpush1.bf16.msra.mxu0 0
    %1063 = vmatprep.subr.bf16.mxu0 0
    %1064 = vmatpush1.bf16.msra.mxu0 0
    %1065 = vmatprep.subr.bf16.mxu0 0
    %1066 = vmatpush1.bf16.msra.mxu0 0
    %1067 = vmatprep.subr.bf16.mxu0 0
    %1068 = vmatpush1.bf16.msra.mxu0 0
    %1069 = vmatprep.subr.bf16.mxu0 0
    %1070 = vmatpush1.bf16.msra.mxu0 0
    %1071 = vmatprep.subr.bf16.mxu0 0
    %1072 = vmatpush1.bf16.msra.mxu0 0
    %1073 = vmatprep.subr.bf16.mxu0 0
    %1074 = vmatpush1.bf16.msra.mxu0 0
    %1075 = vmatprep.mubr.bf16.mxu0 0
    %1076 = vmatmul.mubr.bf16.gmra.mrb[0].mxu0 %v972
    %v1077 = vpop.f32.mrb[0].mxu0
    %v1078 = vadd.f32 %v994, %v1077
    %v1079 = vpop.f32.mrb[0].mxu0
    %v1080 = vpop.f32.mrb[0].mxu0
    %v1081 = vpop.f32.mrb[0].mxu0
    %1082 = vdwg.mxu0
    %1083 = vst [vmem:[#allocation8] sm:$0xff] %v1078
    // Predicated region
    $region30: #{tpu_custom_call.1} parent=1 // pred_check
      _
    $region31: #{tpu_custom_call.1} parent=1 // pred_check_branch
      %1085 = sbr.rel (0) target = $region33
    $region32: #{tpu_custom_call.1} parent=1 // pred_region
      %s1087 = ssub.s32 128, 128
      %1088 = vsyncadd [#allocation4], %s1087
      %s1090 = sshll.u32 [#allocation8], 4
      %s1091 = int_to_ptr.vmem [resolvable:$true] %s1090
      %1093 = dma.vmem_to_hbm [thread:$0]  %s1091, 128, %s4, [#allocation4]
    $region33: #{tpu_custom_call.1} parent=1 // pred_fallthru
      _
    // Predicated region
    $region34: #{tpu_custom_call.1} parent=1 // pred_check
      _
    $region35: #{tpu_custom_call.1} parent=1 // pred_check_branch
      %1095 = sbr.rel (0) target = $region37
    $region36: #{tpu_custom_call.1} parent=1 // pred_region
      %1096 = dma.done [#allocation4], 128
    $region37: #{tpu_custom_call.1} parent=1 // pred_fallthru
      _
    %1097 = vsyncpa [#allocation3], 1
    %1098 = vsyncpa [#allocation6], 1
    %1099 = vsyncpa [#allocation4], 1

</llo_original>
